<compile_context>
chip_gen: v5e
topology: v5e:2x2
jax: 0.10.0
libtpu: 0.0.40
codegen_flags: <defaults>
</compile_context>

<pallas_src>
import math

import jax
import jax.numpy as jnp
from jax.experimental import pallas as pl
from jax.experimental.pallas import tpu as pltpu


LANE = 128  # TPU lane width; output is padded to this so stores are unmasked.


def dqn_kernel(x_ref, w1_ref, b1_ref, w2_ref, b2_ref, o_ref):
    """Fused 2-layer MLP: o = relu(x @ W1 + b1) @ W2 + b2 (f32 accumulation)."""
    x = x_ref[...]
    h = jnp.dot(x, w1_ref[...], preferred_element_type=jnp.float32) + b1_ref[...]
    h = jnp.maximum(h, 0.0)
    q = jnp.dot(h, w2_ref[...], preferred_element_type=jnp.float32) + b2_ref[...]
    o_ref[...] = q.astype(o_ref.dtype)


def _round_up(n, m):
    return ((n + m - 1) // m) * m


def _cost_estimate(B, D, H, A_pad):
    return pl.CostEstimate(
        flops=2 * B * (D * H + H * A_pad),
        transcendentals=0,
        bytes_accessed=4 * (B * D + D * H + H + H * A_pad + A_pad + B * A_pad),
    )


def pack_dqn_params(w1, b1, w2, b2):
    """Prepare kernel operands (done once, outside the hot path).

    w1: (D, H), b1: (H,), w2: (H, A), b2: (A,)  — (in, out) layout, i.e. torch W^T.
    W2/b2 are zero-padded along the action axis to A_pad=128 so output stores are
    lane-dense; the wrapper slices the real actions back out.
    """
    D, H = w1.shape
    A = w2.shape[1]
    A_pad = _round_up(max(A, LANE), LANE)
    w2p = jnp.zeros((H, A_pad), jnp.float32).at[:, :A].set(w2)
    b2p = jnp.zeros((1, A_pad), jnp.float32).at[:, :A].set(b2.reshape(1, A))
    return {
        "w1": w1.astype(jnp.float32),
        "b1": b1.reshape(1, H).astype(jnp.float32),
        "w2": w2p,
        "b2": b2p,
        "num_actions": A,
    }


def dqn_forward(x, params, *, block_b=4096):
    """x: (B, D) f32. Returns Q-values (B, num_actions) f32.

    Routing:
      B <= block_b : single grid-less call, everything resident in VMEM
                     (best on v5e/v6e: one TensorCore, no per-step overhead).
      B >  block_b : batch-tiled grid, weights resident across the grid, batch axis
                     marked "parallel" (v7x shards it across its 2 TensorCores).
    """
    w1, b1, w2, b2 = params["w1"], params["b1"], params["w2"], params["b2"]
    A = params["num_actions"]
    B, D = x.shape
    H = w1.shape[1]
    A_pad = w2.shape[1]

    if B <= block_b:
        q_pad = pl.pallas_call(
            dqn_kernel,
            out_shape=jax.ShapeDtypeStruct((B, A_pad), jnp.float32),
            in_specs=[pl.BlockSpec(memory_space=pltpu.MemorySpace.VMEM)] * 5,
            out_specs=pl.BlockSpec(memory_space=pltpu.MemorySpace.VMEM),
            cost_estimate=_cost_estimate(B, D, H, A_pad),
        )(x, w1, b1, w2, b2)
        return q_pad[:, :A]

    # Large batch: tile only the batch dimension. No wrapper-side padding of x —
    # Pallas masks the ragged last block's output writes; padded rows are garbage
    # but never consumed (rows are independent).
    grid = (pl.cdiv(B, block_b),)
    q_pad = pl.pallas_call(
        dqn_kernel,
        out_shape=jax.ShapeDtypeStruct((B, A_pad), jnp.float32),
        grid=grid,
        in_specs=[
            pl.BlockSpec((block_b, D), lambda i: (i, 0)),
            pl.BlockSpec(w1.shape, lambda i: (0, 0)),  # resident across grid
            pl.BlockSpec(b1.shape, lambda i: (0, 0)),
            pl.BlockSpec(w2.shape, lambda i: (0, 0)),
            pl.BlockSpec(b2.shape, lambda i: (0, 0)),
        ],
        out_specs=pl.BlockSpec((block_b, A_pad), lambda i: (i, 0)),
        compiler_params=pltpu.CompilerParams(
            dimension_semantics=("parallel",),  # independent batch axis (2 TCs on v7x)
        ),
        cost_estimate=_cost_estimate(B, D, H, A_pad),
    )(x, w1, b1, w2, b2)
    return q_pad[:, :A]


def init_dqn_params(key, state_dim, hidden_units, num_actions):
    """torch.nn.Linear default init: U(-1/sqrt(fan_in), 1/sqrt(fan_in)) for W and b."""
    k1, k2, k3, k4 = jax.random.split(key, 4)
    bound1 = 1.0 / math.sqrt(state_dim)
    bound2 = 1.0 / math.sqrt(hidden_units)
    w1 = jax.random.uniform(k1, (state_dim, hidden_units), jnp.float32, -bound1, bound1)
    b1 = jax.random.uniform(k2, (hidden_units,), jnp.float32, -bound1, bound1)
    w2 = jax.random.uniform(k3, (hidden_units, num_actions), jnp.float32, -bound2, bound2)
    b2 = jax.random.uniform(k4, (num_actions,), jnp.float32, -bound2, bound2)
    return pack_dqn_params(w1, b1, w2, b2)


def _reference(x, params):
    A = params["num_actions"]
    h = jnp.maximum(x @ params["w1"] + params["b1"], 0.0)
    return (h @ params["w2"] + params["b2"])[:, :A]


if __name__ == "__main__":
    # Taxi-v3 "positions" encoding: state_dim=19; hidden_units=32; num_actions=6.
    state_dim = 19
    hidden_units = 32
    num_actions = 6

    key = jax.random.PRNGKey(0)
    kx, kp, kx2 = jax.random.split(key, 3)
    params = init_dqn_params(kp, state_dim, hidden_units, num_actions)

    # --- small batch (grid-less path), like select_action / small replay batches ---
    batch = 8
    x = jax.random.uniform(kx, (batch, state_dim), jnp.float32)
    x = (x > 0.7).astype(jnp.float32)  # sparse 0/1 features, same flavor as the encoder

    q_vals = jax.block_until_ready(dqn_forward(x, params))
    ref = _reference(x, params)
    assert q_vals.shape == (batch, num_actions)
    assert jnp.allclose(q_vals, ref, atol=1e-5, rtol=1e-5)

    # --- larger, ragged batch exercising the tiled path (3 grid steps, masked tail) ---
    big_batch = 600
    xb = (jax.random.uniform(kx2, (big_batch, state_dim), jnp.float32) > 0.7).astype(jnp.float32)
    qb = jax.block_until_ready(dqn_forward(xb, params, block_b=256))
    refb = _reference(xb, params)
    assert qb.shape == (big_batch, num_actions)
    assert jnp.allclose(qb, refb, atol=1e-5, rtol=1e-5)

    # TODO(synk): is_dropout=True path (train-mode dropout) not emitted; eval semantics only.
    print("KERNEL_OK")
</pallas_src>

<mosaic_0001>
module attributes {stable_mosaic.version = 11 : i64} {
  func.func @dqn_kernel(%arg0: memref<8x19xf32, #tpu.memory_space<vmem>>, %arg1: memref<19x32xf32, #tpu.memory_space<vmem>>, %arg2: memref<1x32xf32, #tpu.memory_space<vmem>>, %arg3: memref<32x128xf32, #tpu.memory_space<vmem>>, %arg4: memref<1x128xf32, #tpu.memory_space<vmem>>, %arg5: memref<8x128xf32, #tpu.memory_space<vmem>>) attributes {dimension_semantics = [], scalar_prefetch = 0 : i64, scratch_operands = 0 : i64, tpu.core_type = #tpu.core_type<tc>} {
    %c0 = arith.constant 0 : index
    %c0_0 = arith.constant 0 : index
    %0 = vector.load %arg0[%c0, %c0_0] : memref<8x19xf32, #tpu.memory_space<vmem>>, vector<8x19xf32>
    %c0_1 = arith.constant 0 : index
    %c0_2 = arith.constant 0 : index
    %1 = vector.load %arg1[%c0_1, %c0_2] : memref<19x32xf32, #tpu.memory_space<vmem>>, vector<19x32xf32>
    %cst = arith.constant dense<0.000000e+00> : vector<8x32xf32>
    %2 = tpu.matmul %0, %1, %cst {dimension_numbers = #tpu.dot_dimension_numbers<[1], [0], [0], [1], [0, 0, 1, 1], [], []>} : vector<8x19xf32>, vector<19x32xf32>, vector<8x32xf32> -> vector<8x32xf32>
    %c0_3 = arith.constant 0 : index
    %c0_4 = arith.constant 0 : index
    %3 = vector.load %arg2[%c0_3, %c0_4] : memref<1x32xf32, #tpu.memory_space<vmem>>, vector<1x32xf32>
    %4 = vector.broadcast %3 : vector<1x32xf32> to vector<8x32xf32>
    %5 = arith.addf %2, %4 : vector<8x32xf32>
    %cst_5 = arith.constant 0.000000e+00 : f32
    %6 = vector.broadcast %cst_5 : f32 to vector<8x32xf32>
    %7 = arith.maximumf %5, %6 : vector<8x32xf32>
    %c0_6 = arith.constant 0 : index
    %c0_7 = arith.constant 0 : index
    %8 = vector.load %arg3[%c0_6, %c0_7] : memref<32x128xf32, #tpu.memory_space<vmem>>, vector<32x128xf32>
    %cst_8 = arith.constant dense<0.000000e+00> : vector<8x128xf32>
    %9 = tpu.matmul %7, %8, %cst_8 {dimension_numbers = #tpu.dot_dimension_numbers<[1], [0], [0], [1], [0, 0, 1, 1], [], []>} : vector<8x32xf32>, vector<32x128xf32>, vector<8x128xf32> -> vector<8x128xf32>
    %c0_9 = arith.constant 0 : index
    %c0_10 = arith.constant 0 : index
    %10 = vector.load %arg4[%c0_9, %c0_10] : memref<1x128xf32, #tpu.memory_space<vmem>>, vector<1x128xf32>
    %11 = vector.broadcast %10 : vector<1x128xf32> to vector<8x128xf32>
    %12 = arith.addf %9, %11 : vector<8x128xf32>
    %c0_11 = arith.constant 0 : index
    %c0_12 = arith.constant 0 : index
    %13 = vector.load %arg5[%c0_11, %c0_12] : memref<8x128xf32, #tpu.memory_space<vmem>>, vector<8x128xf32>
    tpu.vector_store %arg5[%c0_11, %c0_12], %12 {strides = array<i32>} : memref<8x128xf32, #tpu.memory_space<vmem>>, vector<8x128xf32>,
    return
  }
}

</mosaic_0001>

<llo_original>
// kernel: tpu_custom_call.1
$region0: #{tpu_custom_call.1}
  #allocation0 [shape = 'u32[]', space=smem, size = 0x4, offset = 0x4, fixed_abs, tag = 'smem constant byte address 0x4 - core index']
  #allocation1 [shape = 'u32[72,128]{1,0:T(1,128)}', space=vmem, size = 0x9000, scoped, tag = 'internal scratch']
  %s0 = inlined_call_operand.hbm [shape: f32[8,19], index: 0, kind: input, shape index: {}]
  %s1 = inlined_call_operand.hbm [shape: f32[19,32], index: 1, kind: input, shape index: {}]
  %s2 = inlined_call_operand.vmem [shape: f32[1,32], index: 2, kind: input, shape index: {}]
  %s3 = inlined_call_operand.hbm [shape: f32[32,128], index: 3, kind: input, shape index: {}]
  %s4 = inlined_call_operand.vmem [shape: f32[1,128], index: 4, kind: input, shape index: {}]
  %s5 = inlined_call_operand.hbm [shape: f32[8,128], index: 5, kind: output, shape index: {}]
  %s6 = sld [smem:[#allocation0]]
  $region42: #{tpu_custom_call.1} parent=0
    _
  %s8 = ssub.s32 1, %s6
  %s9 = scalar_select 0, %s8, %s6
  $region1: #{tpu_custom_call.1} parent=0
    #allocation2 [shape = 'u8[4096]{0}', space=vmem, size = 0x1000, scoped, tag = 'input window, operand 0, single buffered']
    #allocation3 [shape = 's32[1]{0}', space=sflag, size = 0x4, scoped, tag = 'scoped memory for tpu_custom_call.1']
    #allocation4 [shape = 's32[1]{0}', space=sflag, size = 0x4, scoped, tag = 'scoped memory for tpu_custom_call.1']
    #allocation5 [shape = 'u8[12288]{0}', space=vmem, size = 0x3000, scoped, tag = 'input window, operand 1, single buffered']
    #allocation6 [shape = 's32[1]{0}', space=sflag, size = 0x4, scoped, tag = 'scoped memory for tpu_custom_call.1']
    #allocation7 [shape = 'u8[16384]{0}', space=vmem, size = 0x4000, scoped, tag = 'input window, operand 3, single buffered']
    #allocation8 [shape = 'u8[4096]{0}', space=vmem, size = 0x1000, scoped, tag = 'output window, operand 0, single buffered']
    %10 = vsyncpa [#allocation3], 0
    %11 = vsyncpa [#allocation6], 0
    %12 = vsyncpa [#allocation4], 0
    // Predicated region
    $region2: #{tpu_custom_call.1} parent=1 // pred_check
      _
    $region3: #{tpu_custom_call.1} parent=1 // pred_check_branch
      %14 = sbr.rel (0) target = $region5
    $region4: #{tpu_custom_call.1} parent=1 // pred_region
      %16 = vsyncadd [#allocation3], 0
      %s18 = sshll.u32 %s0, 4
      %s19 = int_to_ptr.hbm [resolvable:$true] %s18
      %s20 = sshll.u32 [#allocation2], 4
      %s21 = int_to_ptr.vmem [resolvable:$true] %s20
      %23 = dma.hbm_to_vmem [thread:$0]  %s19, 128, %s21, [#allocation3]
    $region5: #{tpu_custom_call.1} parent=1 // pred_fallthru
      _
    // Predicated region
    $region6: #{tpu_custom_call.1} parent=1 // pred_check
      _
    $region7: #{tpu_custom_call.1} parent=1 // pred_check_branch
      %25 = sbr.rel (0) target = $region9
    $region8: #{tpu_custom_call.1} parent=1 // pred_region
      %27 = vsyncadd [#allocation6], 0
      %s28 = sshll.u32 %s1, 4
      %s29 = int_to_ptr.hbm [resolvable:$true] %s28
      %s30 = sshll.u32 [#allocation5], 4
      %s31 = int_to_ptr.vmem [resolvable:$true] %s30
      %36 = dma.hbm_to_vmem [thread:$0]  %s29, 384, %s31, [#allocation6], 128, 128, 8
    $region9: #{tpu_custom_call.1} parent=1 // pred_fallthru
      _
    // Predicated region
    $region10: #{tpu_custom_call.1} parent=1 // pred_check
      _
    $region11: #{tpu_custom_call.1} parent=1 // pred_check_branch
      %38 = sbr.rel (0) target = $region13
    $region12: #{tpu_custom_call.1} parent=1 // pred_region
      _
    $region13: #{tpu_custom_call.1} parent=1 // pred_fallthru
      _
    // Predicated region
    $region14: #{tpu_custom_call.1} parent=1 // pred_check
      _
    $region15: #{tpu_custom_call.1} parent=1 // pred_check_branch
      %40 = sbr.rel (0) target = $region17
    $region16: #{tpu_custom_call.1} parent=1 // pred_region
      %42 = vsyncadd [#allocation6], 0
      %s43 = sshll.u32 %s3, 4
      %s44 = int_to_ptr.hbm [resolvable:$true] %s43
      %s45 = sshll.u32 [#allocation7], 4
      %s46 = int_to_ptr.vmem [resolvable:$true] %s45
      %51 = dma.hbm_to_vmem [thread:$0]  %s44, 512, %s46, [#allocation6], 128, 128, 8
    $region17: #{tpu_custom_call.1} parent=1 // pred_fallthru
      _
    // Predicated region
    $region18: #{tpu_custom_call.1} parent=1 // pred_check
      _
    $region19: #{tpu_custom_call.1} parent=1 // pred_check_branch
      %53 = sbr.rel (0) target = $region21
    $region20: #{tpu_custom_call.1} parent=1 // pred_region
      _
    $region21: #{tpu_custom_call.1} parent=1 // pred_fallthru
      _
    // Predicated region
    $region22: #{tpu_custom_call.1} parent=1 // pred_check
      _
    $region23: #{tpu_custom_call.1} parent=1 // pred_check_branch
      %55 = sbr.rel (0) target = $region25
    $region24: #{tpu_custom_call.1} parent=1 // pred_region
      %57 = dma.done [#allocation3], 128
    $region25: #{tpu_custom_call.1} parent=1 // pred_fallthru
      _
    // Predicated region
    $region26: #{tpu_custom_call.1} parent=1 // pred_check
      _
    $region27: #{tpu_custom_call.1} parent=1 // pred_check_branch
      %59 = sbr.rel (0) target = $region29
    $region28: #{tpu_custom_call.1} parent=1 // pred_region
      %61 = dma.done [#allocation6], 384
    $region29: #{tpu_custom_call.1} parent=1 // pred_fallthru
      _
    // Predicated region
    $region30: #{tpu_custom_call.1} parent=1 // pred_check
      _
    $region31: #{tpu_custom_call.1} parent=1 // pred_check_branch
      %63 = sbr.rel (0) target = $region33
    $region32: #{tpu_custom_call.1} parent=1 // pred_region
      %65 = dma.done [#allocation6], 512
    $region33: #{tpu_custom_call.1} parent=1 // pred_fallthru
      _
    %v66 = vld [vmem:[#allocation2] sm:$0xff]
    %v67 = vld [vmem:[#allocation5] sm:$0xff]
    %v68 = vld [vmem:[#allocation5 + $0x8] sm:$0xff]
    %v69 = vld [vmem:[#allocation5 + $0x10] sm:$0x7]
    %v70 = vld [vmem:[%s2] sm:$0x1]
    %v72 = vperm.slane %v70, 0
    %vm74 = vcmask 154624
    %v76 = vsel %vm74, %v66, 0
    %vm78 = vcmask 1042432
    %v80 = vsel %vm78, %v69, 0
    %82 = vmatpush.msra.mxu0 0.0
    %83 = vmatpush.msra.mxu0 0.0
    %84 = vmatpush.msra.mxu0 0.0
    %85 = vmatpush.msra.mxu0 0.0
    %86 = vmatpush.msra.mxu0 0.0
    %87 = vmatpush.msra.mxu0 0.0
    %88 = vmatpush.msra.mxu0 0.0
    %89 = vmatpush.msra.mxu0 0.0
    %90 = vmatpush.msra.mxu0 0.0
    %91 = vmatpush.msra.mxu0 0.0
    %92 = vmatpush.msra.mxu0 0.0
    %93 = vmatpush.msra.mxu0 0.0
    %94 = vmatpush.msra.mxu0 0.0
    %95 = vmatpush.msra.mxu0 %v80
    %96 = vmatpush.msra.mxu0 %v68
    %97 = vmatpush.msra.mxu0 %v67
    %98 = vmatmul.f32.gmra.mxu0 %v76
    %v99 = vpop.f32.mrf.mxu0
    %v100 = vadd.f32 %v72, %v99
    %101 = vdwg.mxu0
    %v102 = vmax.f32 %v100, 0.0
    %v103 = vld [vmem:[#allocation7] sm:$0xff]
    %v104 = vld [vmem:[#allocation7 + $0x8] sm:$0xff]
    %v105 = vld [vmem:[#allocation7 + $0x10] sm:$0xff]
    %v106 = vld [vmem:[#allocation7 + $0x18] sm:$0xff]
    %v107 = vld [vmem:[%s4] sm:$0x1]
    %v109 = vperm.slane %v107, 0
    %vm111 = vcmask 261120
    %v113 = vsel %vm111, %v102, 0
    %115 = vmatpush.msra.mxu0 0.0
    %116 = vmatpush.msra.mxu0 0.0
    %117 = vmatpush.msra.mxu0 0.0
    %118 = vmatpush.msra.mxu0 0.0
    %119 = vmatpush.msra.mxu0 0.0
    %120 = vmatpush.msra.mxu0 0.0
    %121 = vmatpush.msra.mxu0 0.0
    %122 = vmatpush.msra.mxu0 0.0
    %123 = vmatpush.msra.mxu0 0.0
    %124 = vmatpush.msra.mxu0 0.0
    %125 = vmatpush.msra.mxu0 0.0
    %126 = vmatpush.msra.mxu0 0.0
    %127 = vmatpush.msra.mxu0 %v106
    %128 = vmatpush.msra.mxu0 %v105
    %129 = vmatpush.msra.mxu0 %v104
    %130 = vmatpush.msra.mxu0 %v103
    %131 = vmatmul.f32.gmra.mxu0 %v113
    %v132 = vpop.f32.mrf.mxu0
    %v133 = vadd.f32 %v109, %v132
    %134 = vdwg.mxu0
    %135 = vst [vmem:[#allocation8] sm:$0xff] %v133
    // Predicated region
    $region34: #{tpu_custom_call.1} parent=1 // pred_check
      _
    $region35: #{tpu_custom_call.1} parent=1 // pred_check_branch
      %137 = sbr.rel (0) target = $region37
    $region36: #{tpu_custom_call.1} parent=1 // pred_region
      %139 = vsyncadd [#allocation4], 0
      %s141 = sshll.u32 [#allocation8], 4
      %s142 = int_to_ptr.vmem [resolvable:$true] %s141
      %s143 = sshll.u32 %s5, 4
      %s144 = int_to_ptr.hbm [resolvable:$true] %s143
      %146 = dma.vmem_to_hbm [thread:$0]  %s142, 128, %s144, [#allocation4]
    $region37: #{tpu_custom_call.1} parent=1 // pred_fallthru
      _
    // Predicated region
    $region38: #{tpu_custom_call.1} parent=1 // pred_check
      _
    $region39: #{tpu_custom_call.1} parent=1 // pred_check_branch
      %148 = sbr.rel (0) target = $region41
    $region40: #{tpu_custom_call.1} parent=1 // pred_region
      %150 = dma.done [#allocation4], 128
    $region41: #{tpu_custom_call.1} parent=1 // pred_fallthru
      _
    %151 = vsyncpa [#allocation3], 1
    %152 = vsyncpa [#allocation6], 1
    %153 = vsyncpa [#allocation4], 1

</llo_original>
